<compile_context>
chip_gen: v6e
topology: v6e:2x2x1
jax: 0.10.0
libtpu: 0.0.40
codegen_flags: <defaults>
</compile_context>

<pallas_src>
import functools
import math

import jax
import jax.numpy as jnp
from jax.experimental import pallas as pl
from jax.experimental.pallas import tpu as pltpu


def _round_up(x: int, m: int) -> int:
    return ((x + m - 1) // m) * m


# ---------------------------------------------------------------------------
# Fused MLP kernel: chain of (matmul + bias + ReLU), all weights VMEM-resident
# ---------------------------------------------------------------------------
def _fc_encoder_kernel(x_ref, *refs, num_layers: int):
    """refs = (w0, b0, w1, b1, ..., w_{L-1}, b_{L-1}, out_ref)."""
    out_ref = refs[-1]
    h = x_ref[...]                                   # (tm, obs) f32
    for i in range(num_layers):
        w = refs[2 * i][...]                         # (K_i, N_i) bf16, resident
        b = refs[2 * i + 1][...]                     # (1, N_i)  f32
        acc = jnp.dot(h.astype(w.dtype), w,
                      preferred_element_type=jnp.float32)   # MXU, f32 acc
        h = jnp.maximum(acc + b, 0.0)                # bias + ReLU on VPU (f32)
    out_ref[...] = h.astype(out_ref.dtype)


# ---------------------------------------------------------------------------
# Wrapper: single pallas_call over batch-row tiles
# ---------------------------------------------------------------------------
def fc_encoder_forward(x, params):
    ws = params["w"]                                 # list of (K_i, N_i) bf16
    bs = params["b"]                                 # list of (1, N_i)  f32
    num_layers = len(ws)
    B, K0 = x.shape
    n_last = ws[-1].shape[1]

    # Small-batch friendly row tile: multiple of 8 sublanes, capped at 128.
    tm = min(128, _round_up(B, 8))
    b_pad = _round_up(B, tm)
    if b_pad != B:
        # Padded rows only ever see relu(bias) chains; sliced off at the end.
        x = jnp.pad(x, ((0, b_pad - B), (0, 0)))

    in_specs = [pl.BlockSpec((tm, K0), lambda i: (i, 0))]    # row tile of obs
    flat_wb = []
    for w, b in zip(ws, bs):
        in_specs.append(pl.BlockSpec(w.shape, lambda i: (0, 0)))   # resident
        in_specs.append(pl.BlockSpec(b.shape, lambda i: (0, 0)))   # resident
        flat_wb.extend([w, b])

    out = pl.pallas_call(
        functools.partial(_fc_encoder_kernel, num_layers=num_layers),
        out_shape=jax.ShapeDtypeStruct((b_pad, n_last), jnp.float32),
        grid_spec=pltpu.PrefetchScalarGridSpec(
            num_scalar_prefetch=0,
            grid=(b_pad // tm,),
            in_specs=in_specs,
            out_specs=pl.BlockSpec((tm, n_last), lambda i: (i, 0)),
        ),
        compiler_params=pltpu.CompilerParams(
            dimension_semantics=("parallel",)),        # megacore-shardable
    )(x, *flat_wb)
    return out[:B]


# ---------------------------------------------------------------------------
# Parameter init (PyTorch nn.Linear-style uniform fan-in bounds), weights
# stored already transposed to (in, out) matmul layout and cast to bf16.
# ---------------------------------------------------------------------------
def init_params(key, obs_shape, hidden_size_list, compute_dtype=jnp.bfloat16):
    sizes = [obs_shape] + list(hidden_size_list)
    ws, bs = [], []
    for i in range(len(hidden_size_list)):
        key, kw, kb = jax.random.split(key, 3)
        fan_in, fan_out = sizes[i], sizes[i + 1]
        bound = 1.0 / math.sqrt(fan_in)
        w = jax.random.uniform(kw, (fan_in, fan_out), jnp.float32, -bound, bound)
        b = jax.random.uniform(kb, (fan_out,), jnp.float32, -bound, bound)
        ws.append(w.astype(compute_dtype))            # (K, N) bf16 MXU operand
        bs.append(b.reshape(1, fan_out).astype(jnp.float32))
    return {"w": ws, "b": bs}


if __name__ == "__main__":
    batch = 2
    obs_shape = 16
    hidden_size_list = [64, 64, 128]                  # final output lane-dense

    key = jax.random.PRNGKey(0)
    key, kx = jax.random.split(key)
    params = init_params(key, obs_shape, hidden_size_list)
    x = jax.random.normal(kx, (batch, obs_shape), jnp.float32)

    fwd = jax.jit(fc_encoder_forward)
    out = jax.block_until_ready(fwd(x, params))

    assert out.shape == (batch, hidden_size_list[-1]), out.shape
    assert out.dtype == jnp.float32
    assert bool(jnp.all(jnp.isfinite(out)))
    assert bool(jnp.all(out >= 0.0))                  # final ReLU applied
    print("KERNEL_OK")
</pallas_src>

<mosaic_0001>
module attributes {stable_mosaic.version = 11 : i64} {
  func.func @_fc_encoder_kernel(%arg0: i32, %arg1: memref<8x16xf32, #tpu.memory_space<vmem>>, %arg2: memref<16x64xbf16, #tpu.memory_space<vmem>>, %arg3: memref<1x64xf32, #tpu.memory_space<vmem>>, %arg4: memref<64x64xbf16, #tpu.memory_space<vmem>>, %arg5: memref<1x64xf32, #tpu.memory_space<vmem>>, %arg6: memref<64x128xbf16, #tpu.memory_space<vmem>>, %arg7: memref<1x128xf32, #tpu.memory_space<vmem>>, %arg8: memref<8x128xf32, #tpu.memory_space<vmem>>) attributes {dimension_semantics = [#tpu.dimension_semantics<parallel>], iteration_bounds = array<i64: 1>, scalar_prefetch = 0 : i64, scratch_operands = 0 : i64, tpu.core_type = #tpu.core_type<tc>, window_params = [{transform_indices = @transform_0, window_bounds = array<i64: 8, 16>}, {pipeline_mode = #tpu.pipeline_mode<synchronous>, transform_indices = @transform_1, window_bounds = array<i64: 16, 64>}, {pipeline_mode = #tpu.pipeline_mode<synchronous>, transform_indices = @transform_2, window_bounds = array<i64: 1, 64>}, {pipeline_mode = #tpu.pipeline_mode<synchronous>, transform_indices = @transform_3, window_bounds = array<i64: 64, 64>}, {pipeline_mode = #tpu.pipeline_mode<synchronous>, transform_indices = @transform_4, window_bounds = array<i64: 1, 64>}, {pipeline_mode = #tpu.pipeline_mode<synchronous>, transform_indices = @transform_5, window_bounds = array<i64: 64, 128>}, {pipeline_mode = #tpu.pipeline_mode<synchronous>, transform_indices = @transform_6, window_bounds = array<i64: 1, 128>}, {transform_indices = @transform_7, window_bounds = array<i64: 8, 128>}]} {
    %c0 = arith.constant 0 : index
    %c0_0 = arith.constant 0 : index
    %0 = vector.load %arg1[%c0, %c0_0] : memref<8x16xf32, #tpu.memory_space<vmem>>, vector<8x16xf32>
    %c0_1 = arith.constant 0 : index
    %c0_2 = arith.constant 0 : index
    %1 = vector.load %arg2[%c0_1, %c0_2] : memref<16x64xbf16, #tpu.memory_space<vmem>>, vector<16x64xbf16>
    %c0_3 = arith.constant 0 : index
    %c0_4 = arith.constant 0 : index
    %2 = vector.load %arg3[%c0_3, %c0_4] : memref<1x64xf32, #tpu.memory_space<vmem>>, vector<1x64xf32>
    %3 = arith.truncf %0 : vector<8x16xf32> to vector<8x16xbf16>
    %cst = arith.constant dense<0.000000e+00> : vector<8x64xf32>
    %4 = tpu.matmul %3, %1, %cst {dimension_numbers = #tpu.dot_dimension_numbers<[1], [0], [0], [1], [0, 0, 1, 1], [], []>} : vector<8x16xbf16>, vector<16x64xbf16>, vector<8x64xf32> -> vector<8x64xf32>
    %5 = vector.broadcast %2 : vector<1x64xf32> to vector<8x64xf32>
    %6 = arith.addf %4, %5 : vector<8x64xf32>
    %cst_5 = arith.constant 0.000000e+00 : f32
    %7 = vector.broadcast %cst_5 : f32 to vector<8x64xf32>
    %8 = arith.maximumf %6, %7 : vector<8x64xf32>
    %c0_6 = arith.constant 0 : index
    %c0_7 = arith.constant 0 : index
    %9 = vector.load %arg4[%c0_6, %c0_7] : memref<64x64xbf16, #tpu.memory_space<vmem>>, vector<64x64xbf16>
    %c0_8 = arith.constant 0 : index
    %c0_9 = arith.constant 0 : index
    %10 = vector.load %arg5[%c0_8, %c0_9] : memref<1x64xf32, #tpu.memory_space<vmem>>, vector<1x64xf32>
    %11 = arith.truncf %8 : vector<8x64xf32> to vector<8x64xbf16>
    %cst_10 = arith.constant dense<0.000000e+00> : vector<8x64xf32>
    %12 = tpu.matmul %11, %9, %cst_10 {dimension_numbers = #tpu.dot_dimension_numbers<[1], [0], [0], [1], [0, 0, 1, 1], [], []>} : vector<8x64xbf16>, vector<64x64xbf16>, vector<8x64xf32> -> vector<8x64xf32>
    %13 = vector.broadcast %10 : vector<1x64xf32> to vector<8x64xf32>
    %14 = arith.addf %12, %13 : vector<8x64xf32>
    %cst_11 = arith.constant 0.000000e+00 : f32
    %15 = vector.broadcast %cst_11 : f32 to vector<8x64xf32>
    %16 = arith.maximumf %14, %15 : vector<8x64xf32>
    %c0_12 = arith.constant 0 : index
    %c0_13 = arith.constant 0 : index
    %17 = vector.load %arg6[%c0_12, %c0_13] : memref<64x128xbf16, #tpu.memory_space<vmem>>, vector<64x128xbf16>
    %c0_14 = arith.constant 0 : index
    %c0_15 = arith.constant 0 : index
    %18 = vector.load %arg7[%c0_14, %c0_15] : memref<1x128xf32, #tpu.memory_space<vmem>>, vector<1x128xf32>
    %19 = arith.truncf %16 : vector<8x64xf32> to vector<8x64xbf16>
    %cst_16 = arith.constant dense<0.000000e+00> : vector<8x128xf32>
    %20 = tpu.matmul %19, %17, %cst_16 {dimension_numbers = #tpu.dot_dimension_numbers<[1], [0], [0], [1], [0, 0, 1, 1], [], []>} : vector<8x64xbf16>, vector<64x128xbf16>, vector<8x128xf32> -> vector<8x128xf32>
    %21 = vector.broadcast %18 : vector<1x128xf32> to vector<8x128xf32>
    %22 = arith.addf %20, %21 : vector<8x128xf32>
    %cst_17 = arith.constant 0.000000e+00 : f32
    %23 = vector.broadcast %cst_17 : f32 to vector<8x128xf32>
    %24 = arith.maximumf %22, %23 : vector<8x128xf32>
    %c0_18 = arith.constant 0 : index
    %c0_19 = arith.constant 0 : index
    %25 = vector.load %arg8[%c0_18, %c0_19] : memref<8x128xf32, #tpu.memory_space<vmem>>, vector<8x128xf32>
    tpu.vector_store %arg8[%c0_18, %c0_19], %24 {strides = array<i32>} : memref<8x128xf32, #tpu.memory_space<vmem>>, vector<8x128xf32>,
    return
  }
  func.func @transform_0(%arg0: i32) -> (i32, i32) {
    %c0_i32 = arith.constant 0 : i32
    %c0_i32_0 = arith.constant 0 : i32
    return %arg0, %c0_i32 : i32, i32
  }
  func.func @transform_1(%arg0: i32) -> (i32, i32) {
    %c0_i32 = arith.constant 0 : i32
    %c0_i32_0 = arith.constant 0 : i32
    %c0_i32_1 = arith.constant 0 : i32
    return %c0_i32, %c0_i32_0 : i32, i32
  }
  func.func @transform_2(%arg0: i32) -> (i32, i32) {
    %c0_i32 = arith.constant 0 : i32
    %c0_i32_0 = arith.constant 0 : i32
    %c0_i32_1 = arith.constant 0 : i32
    return %c0_i32, %c0_i32_0 : i32, i32
  }
  func.func @transform_3(%arg0: i32) -> (i32, i32) {
    %c0_i32 = arith.constant 0 : i32
    %c0_i32_0 = arith.constant 0 : i32
    %c0_i32_1 = arith.constant 0 : i32
    return %c0_i32, %c0_i32_0 : i32, i32
  }
  func.func @transform_4(%arg0: i32) -> (i32, i32) {
    %c0_i32 = arith.constant 0 : i32
    %c0_i32_0 = arith.constant 0 : i32
    %c0_i32_1 = arith.constant 0 : i32
    return %c0_i32, %c0_i32_0 : i32, i32
  }
  func.func @transform_5(%arg0: i32) -> (i32, i32) {
    %c0_i32 = arith.constant 0 : i32
    %c0_i32_0 = arith.constant 0 : i32
    %c0_i32_1 = arith.constant 0 : i32
    return %c0_i32, %c0_i32_0 : i32, i32
  }
  func.func @transform_6(%arg0: i32) -> (i32, i32) {
    %c0_i32 = arith.constant 0 : i32
    %c0_i32_0 = arith.constant 0 : i32
    %c0_i32_1 = arith.constant 0 : i32
    return %c0_i32, %c0_i32_0 : i32, i32
  }
  func.func @transform_7(%arg0: i32) -> (i32, i32) {
    %c0_i32 = arith.constant 0 : i32
    %c0_i32_0 = arith.constant 0 : i32
    return %arg0, %c0_i32 : i32, i32
  }
}

</mosaic_0001>

<llo_original>
// kernel: fc_encoder_forward.1
$region0: #{fc_encoder_forward.1}
  #allocation0 [shape = 'u32[]', space=smem, size = 0x4, offset = 0x4, fixed_abs, tag = 'smem constant byte address 0x4 - core index']
  #allocation1 [shape = 'u32[144,128]{1,0:T(1,128)}', space=vmem, size = 0x12000, scoped, tag = 'internal scratch']
  %s0 = inlined_call_operand.vmem [shape: f32[8,16], index: 0, kind: input, shape index: {}]
  %s1 = inlined_call_operand.vmem [shape: bf16[16,64], index: 1, kind: input, shape index: {}]
  %s2 = inlined_call_operand.vmem [shape: f32[1,64], index: 2, kind: input, shape index: {}]
  %s3 = inlined_call_operand.hbm [shape: bf16[64,64], index: 3, kind: input, shape index: {}]
  %s4 = inlined_call_operand.vmem [shape: f32[1,64], index: 4, kind: input, shape index: {}]
  %s5 = inlined_call_operand.hbm [shape: bf16[64,128], index: 5, kind: input, shape index: {}]
  %s6 = inlined_call_operand.vmem [shape: f32[1,128], index: 6, kind: input, shape index: {}]
  %s7 = inlined_call_operand.vmem [shape: f32[8,128], index: 7, kind: output, shape index: {}]
  %s8 = sld [smem:[#allocation0]]
  $region46: #{fc_encoder_forward.1} parent=0
    _
  %s10 = ssub.s32 1, %s8
  %s11 = scalar_select 0, %s10, %s8
  $region1: #{fc_encoder_forward.1} parent=0
    #allocation2 [shape = 'u8[16384]{0}', space=vmem, size = 0x4000, scoped, tag = 'input window, operand 3, single buffered']
    #allocation3 [shape = 's32[1]{0}', space=sflag, size = 0x4, scoped, tag = 'scoped memory for fc_encoder_forward.1']
    #allocation4 [shape = 'u8[16384]{0}', space=vmem, size = 0x4000, scoped, tag = 'input window, operand 5, single buffered']
    #allocation5 [shape = 's32[1]{0}', space=sflag, size = 0x4, scoped, tag = 'scoped memory for fc_encoder_forward.1']
    %12 = vsyncpa [#allocation3], 0
    %13 = vsyncpa [#allocation5], 0
    // Predicated region
    $region2: #{fc_encoder_forward.1} parent=1 // pred_check
      _
    $region3: #{fc_encoder_forward.1} parent=1 // pred_check_branch
      %15 = sbr.rel (0) target = $region5
    $region4: #{fc_encoder_forward.1} parent=1 // pred_region
      _
    $region5: #{fc_encoder_forward.1} parent=1 // pred_fallthru
      _
    // Predicated region
    $region6: #{fc_encoder_forward.1} parent=1 // pred_check
      _
    $region7: #{fc_encoder_forward.1} parent=1 // pred_check_branch
      %17 = sbr.rel (0) target = $region9
    $region8: #{fc_encoder_forward.1} parent=1 // pred_region
      _
    $region9: #{fc_encoder_forward.1} parent=1 // pred_fallthru
      _
    // Predicated region
    $region10: #{fc_encoder_forward.1} parent=1 // pred_check
      _
    $region11: #{fc_encoder_forward.1} parent=1 // pred_check_branch
      %19 = sbr.rel (0) target = $region13
    $region12: #{fc_encoder_forward.1} parent=1 // pred_region
      _
    $region13: #{fc_encoder_forward.1} parent=1 // pred_fallthru
      _
    // Predicated region
    $region14: #{fc_encoder_forward.1} parent=1 // pred_check
      _
    $region15: #{fc_encoder_forward.1} parent=1 // pred_check_branch
      %21 = sbr.rel (0) target = $region17
    $region16: #{fc_encoder_forward.1} parent=1 // pred_region
      %s23 = ssub.s32 512, 512
      %24 = vsyncadd [#allocation3], %s23
      %s25 = sshll.u32 [#allocation2], 4
      %s26 = int_to_ptr.vmem [resolvable:$true] %s25
      %31 = dma.hbm_to_vmem [thread:$0]  %s3, 512, %s26, [#allocation3], 64, 64, 4
    $region17: #{fc_encoder_forward.1} parent=1 // pred_fallthru
      _
    // Predicated region
    $region18: #{fc_encoder_forward.1} parent=1 // pred_check
      _
    $region19: #{fc_encoder_forward.1} parent=1 // pred_check_branch
      %33 = sbr.rel (0) target = $region21
    $region20: #{fc_encoder_forward.1} parent=1 // pred_region
      _
    $region21: #{fc_encoder_forward.1} parent=1 // pred_fallthru
      _
    // Predicated region
    $region22: #{fc_encoder_forward.1} parent=1 // pred_check
      _
    $region23: #{fc_encoder_forward.1} parent=1 // pred_check_branch
      %35 = sbr.rel (0) target = $region25
    $region24: #{fc_encoder_forward.1} parent=1 // pred_region
      %s37 = ssub.s32 512, 512
      %38 = vsyncadd [#allocation5], %s37
      %s39 = sshll.u32 [#allocation4], 4
      %s40 = int_to_ptr.vmem [resolvable:$true] %s39
      %45 = dma.hbm_to_vmem [thread:$0]  %s5, 512, %s40, [#allocation5], 64, 64, 4
    $region25: #{fc_encoder_forward.1} parent=1 // pred_fallthru
      _
    // Predicated region
    $region26: #{fc_encoder_forward.1} parent=1 // pred_check
      _
    $region27: #{fc_encoder_forward.1} parent=1 // pred_check_branch
      %47 = sbr.rel (0) target = $region29
    $region28: #{fc_encoder_forward.1} parent=1 // pred_region
      _
    $region29: #{fc_encoder_forward.1} parent=1 // pred_fallthru
      _
    // Predicated region
    $region30: #{fc_encoder_forward.1} parent=1 // pred_check
      _
    $region31: #{fc_encoder_forward.1} parent=1 // pred_check_branch
      %49 = sbr.rel (0) target = $region33
    $region32: #{fc_encoder_forward.1} parent=1 // pred_region
      %50 = dma.done [#allocation3], 512
    $region33: #{fc_encoder_forward.1} parent=1 // pred_fallthru
      _
    // Predicated region
    $region34: #{fc_encoder_forward.1} parent=1 // pred_check
      _
    $region35: #{fc_encoder_forward.1} parent=1 // pred_check_branch
      %52 = sbr.rel (0) target = $region37
    $region36: #{fc_encoder_forward.1} parent=1 // pred_region
      %53 = dma.done [#allocation5], 512
    $region37: #{fc_encoder_forward.1} parent=1 // pred_fallthru
      _
    %v55 = vld [vmem:[%s0] sm:$0xff]
    %v56 = vld [vmem:[%s1] sm:$0xf]
    %v57 = vld [vmem:[%s1 + $0x4] sm:$0xf]
    %v58 = vld [vmem:[%s2] sm:$0x1]
    %v59 = vpack.c.bf16 %v55, %v55
    %v61 = vlaneseq
    %v62 = vshrl.u32 %v61, 7
    %v63 = vsub.s32 0, %v62
    %v64 = vrot.slane %v58, %v63
    %v68 = vunpack.c.l.b16 %v56
    %v69 = vunpack.c.l.b16 %v57
    %v70 = vpack.c.b16 %v69, %v68
    %vm72 = vcmask 130048
    %v74 = vsel %vm72, %v59, 0
    %76 = vmatprep.subr.bf16.mxu0 0
    %77 = vmatpush1.bf16.msra.mxu0 0
    %78 = vmatprep.subr.bf16.mxu0 0
    %79 = vmatpush1.bf16.msra.mxu0 0
    %80 = vmatprep.subr.bf16.mxu0 0
    %81 = vmatpush1.bf16.msra.mxu0 0
    %82 = vmatprep.subr.bf16.mxu0 0
    %83 = vmatpush1.bf16.msra.mxu0 0
    %84 = vmatprep.subr.bf16.mxu0 0
    %85 = vmatpush1.bf16.msra.mxu0 0
    %86 = vmatprep.subr.bf16.mxu0 0
    %87 = vmatpush1.bf16.msra.mxu0 0
    %88 = vmatprep.subr.bf16.mxu0 0
    %89 = vmatpush1.bf16.msra.mxu0 0
    %90 = vmatprep.subr.bf16.mxu0 0
    %91 = vmatpush1.bf16.msra.mxu0 %v70
    %92 = vmatprep.subr.bf16.mxu0 0
    %93 = vmatpush2.bf16.msra.mxu0 0
    %94 = vmatprep.subr.bf16.mxu0 0
    %95 = vmatpush2.bf16.msra.mxu0 0
    %96 = vmatprep.subr.bf16.mxu0 0
    %97 = vmatpush2.bf16.msra.mxu0 0
    %98 = vmatprep.subr.bf16.mxu0 0
    %99 = vmatpush2.bf16.msra.mxu0 0
    %100 = vmatprep.subr.bf16.mxu0 0
    %101 = vmatpush2.bf16.msra.mxu0 0
    %102 = vmatprep.subr.bf16.mxu0 0
    %103 = vmatpush2.bf16.msra.mxu0 0
    %104 = vmatprep.subr.bf16.mxu0 0
    %105 = vmatpush2.bf16.msra.mxu0 0
    %106 = vmatprep.subr.bf16.mxu0 0
    %107 = vmatpush2.bf16.msra.mxu0 0
    %108 = vmatprep.mubr.bf16.mxu0 0
    %109 = vmatmul.mubr.bf16.gmra.mxu0 %v74
    %v110 = vpop.f32.mrf.mxu0
    %v111 = vadd.f32 %v64, %v110
    %v112 = vpop.f32.mrf.mxu0
    %v113 = vpop.f32.mrf.mxu0
    %v114 = vpop.f32.mrf.mxu0
    %115 = vdwg.mxu0
    %v116 = vmax.f32 %v111, 0.0
    %v117 = vld [vmem:[#allocation2] sm:$0xf]
    %v118 = vld [vmem:[#allocation2 + $0x4] sm:$0xf]
    %v119 = vld [vmem:[#allocation2 + $0x8] sm:$0xf]
    %v120 = vld [vmem:[#allocation2 + $0xc] sm:$0xf]
    %v121 = vld [vmem:[#allocation2 + $0x10] sm:$0xf]
    %v122 = vld [vmem:[#allocation2 + $0x14] sm:$0xf]
    %v123 = vld [vmem:[#allocation2 + $0x18] sm:$0xf]
    %v124 = vld [vmem:[#allocation2 + $0x1c] sm:$0xf]
    %v125 = vld [vmem:[%s4] sm:$0x1]
    %v126 = vpack.c.bf16 %v116, %v116
    %v128 = vlaneseq
    %v129 = vshrl.u32 %v128, 7
    %v130 = vsub.s32 0, %v129
    %v131 = vrot.slane %v125, %v130
    %v141 = vunpack.c.l.b16 %v117
    %v142 = vunpack.c.l.b16 %v118
    %v143 = vunpack.c.l.b16 %v119
    %v144 = vunpack.c.l.b16 %v120
    %v145 = vunpack.c.l.b16 %v121
    %v146 = vunpack.c.l.b16 %v122
    %v147 = vunpack.c.l.b16 %v123
    %v148 = vunpack.c.l.b16 %v124
    %v149 = vpack.c.b16 %v142, %v141
    %v150 = vpack.c.b16 %v144, %v143
    %v151 = vpack.c.b16 %v146, %v145
    %v152 = vpack.c.b16 %v148, %v147
    %vm157 = vcmask 523264
    %v159 = vsel %vm157, %v126, 0
    %161 = vmatprep.subr.bf16.mxu0 0
    %162 = vmatpush1.bf16.msra.mxu0 0
    %163 = vmatprep.subr.bf16.mxu0 0
    %164 = vmatpush1.bf16.msra.mxu0 0
    %165 = vmatprep.subr.bf16.mxu0 0
    %166 = vmatpush1.bf16.msra.mxu0 0
    %167 = vmatprep.subr.bf16.mxu0 0
    %168 = vmatpush1.bf16.msra.mxu0 0
    %169 = vmatprep.subr.bf16.mxu0 0
    %170 = vmatpush1.bf16.msra.mxu0 %v152
    %171 = vmatprep.subr.bf16.mxu0 0
    %172 = vmatpush1.bf16.msra.mxu0 %v151
    %173 = vmatprep.subr.bf16.mxu0 0
    %174 = vmatpush1.bf16.msra.mxu0 %v150
    %175 = vmatprep.subr.bf16.mxu0 0
    %176 = vmatpush1.bf16.msra.mxu0 %v149
    %177 = vmatprep.subr.bf16.mxu0 0
    %178 = vmatpush2.bf16.msra.mxu0 0
    %179 = vmatprep.subr.bf16.mxu0 0
    %180 = vmatpush2.bf16.msra.mxu0 0
    %181 = vmatprep.subr.bf16.mxu0 0
    %182 = vmatpush2.bf16.msra.mxu0 0
    %183 = vmatprep.subr.bf16.mxu0 0
    %184 = vmatpush2.bf16.msra.mxu0 0
    %185 = vmatprep.subr.bf16.mxu0 0
    %186 = vmatpush2.bf16.msra.mxu0 0
    %187 = vmatprep.subr.bf16.mxu0 0
    %188 = vmatpush2.bf16.msra.mxu0 0
    %189 = vmatprep.subr.bf16.mxu0 0
    %190 = vmatpush2.bf16.msra.mxu0 0
    %191 = vmatprep.subr.bf16.mxu0 0
    %192 = vmatpush2.bf16.msra.mxu0 0
    %193 = vmatprep.mubr.bf16.mxu0 0
    %194 = vmatmul.mubr.bf16.gmra.mxu0 %v159
    %v195 = vpop.f32.mrf.mxu0
    %v196 = vadd.f32 %v131, %v195
    %v197 = vpop.f32.mrf.mxu0
    %v198 = vpop.f32.mrf.mxu0
    %v199 = vpop.f32.mrf.mxu0
    %200 = vdwg.mxu0
    %v201 = vmax.f32 %v196, 0.0
    %v202 = vld [vmem:[#allocation4] sm:$0xf]
    %v203 = vld [vmem:[#allocation4 + $0x4] sm:$0xf]
    %v204 = vld [vmem:[#allocation4 + $0x8] sm:$0xf]
    %v205 = vld [vmem:[#allocation4 + $0xc] sm:$0xf]
    %v206 = vld [vmem:[#allocation4 + $0x10] sm:$0xf]
    %v207 = vld [vmem:[#allocation4 + $0x14] sm:$0xf]
    %v208 = vld [vmem:[#allocation4 + $0x18] sm:$0xf]
    %v209 = vld [vmem:[#allocation4 + $0x1c] sm:$0xf]
    %v210 = vld [vmem:[%s6] sm:$0x1]
    %v211 = vpack.c.bf16 %v201, %v201
    %v213 = vlaneseq
    %v214 = vshrl.u32 %v213, 7
    %v215 = vsub.s32 0, %v214
    %v216 = vrot.slane %v210, %v215
    %v226 = vunpack.c.l.b16 %v202
    %v227 = vunpack.c.l.b16 %v203
    %v228 = vunpack.c.l.b16 %v204
    %v229 = vunpack.c.l.b16 %v205
    %v230 = vunpack.c.l.b16 %v206
    %v231 = vunpack.c.l.b16 %v207
    %v232 = vunpack.c.l.b16 %v208
    %v233 = vunpack.c.l.b16 %v209
    %v234 = vpack.c.b16 %v227, %v226
    %v235 = vpack.c.b16 %v229, %v228
    %v236 = vpack.c.b16 %v231, %v230
    %v237 = vpack.c.b16 %v233, %v232
    %v243 = vsel %vm157, %v211, 0
    %245 = vmatprep.subr.bf16.mxu0 0
    %246 = vmatpush1.bf16.msra.mxu0 0
    %247 = vmatprep.subr.bf16.mxu0 0
    %248 = vmatpush1.bf16.msra.mxu0 0
    %249 = vmatprep.subr.bf16.mxu0 0
    %250 = vmatpush1.bf16.msra.mxu0 0
    %251 = vmatprep.subr.bf16.mxu0 0
    %252 = vmatpush1.bf16.msra.mxu0 0
    %253 = vmatprep.subr.bf16.mxu0 0
    %254 = vmatpush1.bf16.msra.mxu0 %v237
    %255 = vmatprep.subr.bf16.mxu0 0
    %256 = vmatpush1.bf16.msra.mxu0 %v236
    %257 = vmatprep.subr.bf16.mxu0 0
    %258 = vmatpush1.bf16.msra.mxu0 %v235
    %259 = vmatprep.subr.bf16.mxu0 0
    %260 = vmatpush1.bf16.msra.mxu0 %v234
    %261 = vmatprep.subr.bf16.mxu0 0
    %262 = vmatpush2.bf16.msra.mxu0 0
    %263 = vmatprep.subr.bf16.mxu0 0
    %264 = vmatpush2.bf16.msra.mxu0 0
    %265 = vmatprep.subr.bf16.mxu0 0
    %266 = vmatpush2.bf16.msra.mxu0 0
    %267 = vmatprep.subr.bf16.mxu0 0
    %268 = vmatpush2.bf16.msra.mxu0 0
    %269 = vmatprep.subr.bf16.mxu0 0
    %270 = vmatpush2.bf16.msra.mxu0 0
    %271 = vmatprep.subr.bf16.mxu0 0
    %272 = vmatpush2.bf16.msra.mxu0 0
    %273 = vmatprep.subr.bf16.mxu0 0
    %274 = vmatpush2.bf16.msra.mxu0 0
    %275 = vmatprep.subr.bf16.mxu0 0
    %276 = vmatpush2.bf16.msra.mxu0 0
    %277 = vmatprep.mubr.bf16.mxu0 0
    %278 = vmatmul.mubr.bf16.gmra.mxu0 %v243
    %v279 = vpop.f32.mrf.mxu0
    %v280 = vadd.f32 %v216, %v279
    %v281 = vpop.f32.mrf.mxu0
    %v282 = vpop.f32.mrf.mxu0
    %v283 = vpop.f32.mrf.mxu0
    %284 = vdwg.mxu0
    %v285 = vmax.f32 %v280, 0.0
    %286 = vst [vmem:[%s7] sm:$0xff] %v285
    // Predicated region
    $region38: #{fc_encoder_forward.1} parent=1 // pred_check
      _
    $region39: #{fc_encoder_forward.1} parent=1 // pred_check_branch
      %288 = sbr.rel (0) target = $region41
    $region40: #{fc_encoder_forward.1} parent=1 // pred_region
      _
    $region41: #{fc_encoder_forward.1} parent=1 // pred_fallthru
      _
    // Predicated region
    $region42: #{fc_encoder_forward.1} parent=1 // pred_check
      _
    $region43: #{fc_encoder_forward.1} parent=1 // pred_check_branch
      %290 = sbr.rel (0) target = $region45
    $region44: #{fc_encoder_forward.1} parent=1 // pred_region
      _
    $region45: #{fc_encoder_forward.1} parent=1 // pred_fallthru
      _
    %291 = vsyncpa [#allocation3], 1
    %292 = vsyncpa [#allocation5], 1

</llo_original>
